<compile_context>
chip_gen: v6e
topology: v6e:2x2x1
jax: 0.10.0
libtpu: 0.0.40
codegen_flags: <defaults>
</compile_context>

<pallas_src>
import functools

import jax
import jax.numpy as jnp
from jax.experimental import pallas as pl
from jax.experimental.pallas import tpu as pltpu


def _round_up(v, m):
    return (v + m - 1) // m * m


def _cdiv(a, b):
    return -(-a // b)


def _mlp_kernel(x_ref, *refs):
    """Fused MLP on one batch tile. refs = (W0, b0, W1, b1, ..., Wn, bn, out_ref).

    W_i: (in_i_pad, out_i_pad) bf16, b_i: (1, out_i_pad) f32. Accumulation in f32.
    """
    o_ref = refs[-1]
    param_refs = refs[:-1]
    n_layers = len(param_refs) // 2

    h = x_ref[...]  # bf16 activations
    for i in range(n_layers):
        w = param_refs[2 * i][...]        # bf16
        b = param_refs[2 * i + 1][...]    # f32
        acc = jnp.dot(h, w, preferred_element_type=jnp.float32) + b
        if i < n_layers - 1:              # ReLU after every hidden Linear, not the last
            h = jnp.maximum(acc, 0.0).astype(jnp.bfloat16)
        else:
            h = acc                       # final layer: keep f32 until the store
    o_ref[...] = h.astype(o_ref.dtype)


def prepare_mlp_params(params):
    """Pad/cast weights ONCE (hoisted out of the per-call path).

    params: list of (W, b), W:(in,out) f32, b:(1,out) f32 (pre-transposed vs PyTorch).
    Returns (flat_params, pdims): bf16 zero-padded weights, f32 zero-padded biases,
    feature dims rounded up to 128-lane multiples.
    """
    dims = [params[0][0].shape[0]] + [w.shape[1] for (w, _) in params]
    pdims = tuple(_round_up(d, 128) for d in dims)
    flat = []
    for li, (w, b) in enumerate(params):
        ip, op = pdims[li], pdims[li + 1]
        w_p = jnp.zeros((ip, op), jnp.bfloat16).at[: w.shape[0], : w.shape[1]].set(
            w.astype(jnp.bfloat16)
        )
        b_p = jnp.zeros((1, op), jnp.float32).at[:, : b.shape[1]].set(b.astype(jnp.float32))
        flat += [w_p, b_p]
    return tuple(flat), pdims


@functools.partial(jax.jit, static_argnames=("out_dim", "tb"))
def mlp_pallas(x, flat_params, *, out_dim, tb=1024):
    """Run the fused MLP. flat_params from prepare_mlp_params().

    Returns the flattened 1-D f32 output, matching `ret.reshape(-1)` of the PyTorch module.
    """
    x = x.astype(jnp.float32)
    batch, in_dim = x.shape
    n_layers = len(flat_params) // 2
    pdims = [flat_params[0].shape[0]] + [flat_params[2 * i].shape[1] for i in range(n_layers)]

    # Batch tiling: TB multiple of 16 (bf16 packs (16,128) per vreg), minimal
    # final-tile padding, and >=2 grid steps when batch allows so the parallel
    # axis can be sharded across both TensorCores on v7x.
    batch16 = _round_up(batch, 16)
    n_tiles = max(1, _cdiv(batch16, tb))
    if batch16 >= 32 and n_tiles < 2:
        n_tiles = 2
    TB = _round_up(_cdiv(batch16, n_tiles), 16)
    batch_p = TB * n_tiles

    # Lane-dense, zero-padded bf16 input (only x is re-padded per call).
    x_p = jnp.zeros((batch_p, pdims[0]), jnp.bfloat16)
    x_p = x_p.at[:batch, :in_dim].set(x.astype(jnp.bfloat16))

    # x / out tiles: default double-buffered pipeline over the batch grid.
    # Weights/biases: constant index map -> resident in VMEM; single-buffer them
    # so only one copy lives in VMEM instead of two.
    in_specs = [pl.BlockSpec((TB, pdims[0]), lambda i: (i, 0))]
    for li in range(n_layers):
        ip, op = pdims[li], pdims[li + 1]
        in_specs.append(
            pl.BlockSpec((ip, op), lambda i: (0, 0), pipeline_mode=pl.Buffered(1))
        )
        in_specs.append(
            pl.BlockSpec((1, op), lambda i: (0, 0), pipeline_mode=pl.Buffered(1))
        )
    out_spec = pl.BlockSpec((TB, pdims[-1]), lambda i: (i, 0))

    out_dtype = jnp.bfloat16  # halve output writeback; cast back to f32 after slicing

    # Explicit VMEM budget: 2x x tile + 2x out tile (double buffered),
    # 1x resident weights/biases, activation scratch, plus headroom.
    weights_bytes = sum(int(a.size) * a.dtype.itemsize for a in flat_params)
    act_bytes = TB * max(pdims) * 4  # widest f32 intermediate activation
    footprint = (
        2 * TB * pdims[0] * 2        # double-buffered bf16 x tiles
        + 2 * TB * pdims[-1] * 2     # double-buffered bf16 out tiles
        + weights_bytes              # single-buffered resident params
        + 2 * act_bytes              # intermediate activations / compiler scratch
    )
    vmem_bytes = min(max(int(footprint * 1.25) + (4 << 20), 32 << 20), 64 << 20)

    flops = 2 * batch_p * sum(pdims[i] * pdims[i + 1] for i in range(n_layers))
    bytes_accessed = (
        x_p.size * x_p.dtype.itemsize
        + weights_bytes
        + batch_p * pdims[-1] * jnp.dtype(out_dtype).itemsize
    )

    out_padded = pl.pallas_call(
        _mlp_kernel,
        out_shape=jax.ShapeDtypeStruct((batch_p, pdims[-1]), out_dtype),
        grid=(n_tiles,),
        in_specs=in_specs,
        out_specs=out_spec,
        compiler_params=pltpu.CompilerParams(
            dimension_semantics=("parallel",),  # shard batch tiles across TCs (v7x)
            vmem_limit_bytes=vmem_bytes,
        ),
        cost_estimate=pl.CostEstimate(
            flops=flops, transcendentals=0, bytes_accessed=bytes_accessed
        ),
    )(x_p, *flat_params)

    # Glue: drop padding, cast back to f32, flatten exactly like `ret.reshape(-1)`.
    return out_padded[:batch, :out_dim].astype(jnp.float32).reshape(-1)


def init_mlp_params(key, in_dim, out_dim, hidden_list):
    """Deterministic init matching the PyTorch module's layer shapes (stored as (in, out))."""
    dims = [in_dim] + list(hidden_list) + [out_dim]
    params = []
    for i in range(len(dims) - 1):
        key, kw, kb = jax.random.split(key, 3)
        fan_in, fan_out = dims[i], dims[i + 1]
        bound = 1.0 / jnp.sqrt(jnp.float32(fan_in))
        w = jax.random.uniform(kw, (fan_in, fan_out), jnp.float32, -bound, bound)
        b = jax.random.uniform(kb, (1, fan_out), jnp.float32, -bound, bound)
        params.append((w, b))
    return params


if __name__ == "__main__":
    key = jax.random.PRNGKey(0)
    key, kx = jax.random.split(key)

    # Small shapes consistent with the module: generic MLP on (batch, in_dim).
    batch, in_dim, out_dim = 8, 4, 3
    hidden_list = [32, 32]

    x = jax.random.normal(kx, (batch, in_dim), dtype=jnp.float32)
    params = init_mlp_params(key, in_dim, out_dim, hidden_list)

    # One-time padding/casting of weights (hoisted out of the per-call path).
    flat_params, _ = prepare_mlp_params(params)

    out = mlp_pallas(x, flat_params, out_dim=out_dim)
    jax.block_until_ready(out)

    # Reference in plain JAX (f32 end-to-end); kernel uses bf16 operands/output -> looser tol.
    h = x
    for i, (w, b) in enumerate(params):
        h = h @ w + b
        if i < len(params) - 1:
            h = jnp.maximum(h, 0.0)
    ref = h.reshape(-1)

    assert out.shape == (batch * out_dim,)
    assert jnp.allclose(out, ref, atol=3e-2, rtol=3e-2), (
        f"max abs err {jnp.max(jnp.abs(out - ref))}"
    )

    print("KERNEL_OK")
</pallas_src>

<mosaic_0001>
module attributes {stable_mosaic.version = 11 : i64} {
  func.func @_mlp_kernel(%arg0: i32, %arg1: memref<16x128xbf16, #tpu.memory_space<vmem>>, %arg2: memref<128x128xbf16, #tpu.memory_space<vmem>>, %arg3: memref<1x128xf32, #tpu.memory_space<vmem>>, %arg4: memref<128x128xbf16, #tpu.memory_space<vmem>>, %arg5: memref<1x128xf32, #tpu.memory_space<vmem>>, %arg6: memref<128x128xbf16, #tpu.memory_space<vmem>>, %arg7: memref<1x128xf32, #tpu.memory_space<vmem>>, %arg8: memref<16x128xbf16, #tpu.memory_space<vmem>>) attributes {dimension_semantics = [#tpu.dimension_semantics<parallel>], iteration_bounds = array<i64: 1>, scalar_prefetch = 0 : i64, scratch_operands = 0 : i64, tpu.core_type = #tpu.core_type<tc>, window_params = [{transform_indices = @transform_0, window_bounds = array<i64: 16, 128>}, {pipeline_mode = #tpu.pipeline_mode<synchronous>, transform_indices = @transform_1, window_bounds = array<i64: 128, 128>}, {pipeline_mode = #tpu.pipeline_mode<synchronous>, transform_indices = @transform_2, window_bounds = array<i64: 1, 128>}, {pipeline_mode = #tpu.pipeline_mode<synchronous>, transform_indices = @transform_3, window_bounds = array<i64: 128, 128>}, {pipeline_mode = #tpu.pipeline_mode<synchronous>, transform_indices = @transform_4, window_bounds = array<i64: 1, 128>}, {pipeline_mode = #tpu.pipeline_mode<synchronous>, transform_indices = @transform_5, window_bounds = array<i64: 128, 128>}, {pipeline_mode = #tpu.pipeline_mode<synchronous>, transform_indices = @transform_6, window_bounds = array<i64: 1, 128>}, {transform_indices = @transform_7, window_bounds = array<i64: 16, 128>}]} {
    %c0 = arith.constant 0 : index
    %c0_0 = arith.constant 0 : index
    %0 = vector.load %arg1[%c0, %c0_0] : memref<16x128xbf16, #tpu.memory_space<vmem>>, vector<16x128xbf16>
    %c0_1 = arith.constant 0 : index
    %c0_2 = arith.constant 0 : index
    %1 = vector.load %arg2[%c0_1, %c0_2] : memref<128x128xbf16, #tpu.memory_space<vmem>>, vector<128x128xbf16>
    %c0_3 = arith.constant 0 : index
    %c0_4 = arith.constant 0 : index
    %2 = vector.load %arg3[%c0_3, %c0_4] : memref<1x128xf32, #tpu.memory_space<vmem>>, vector<1x128xf32>
    %cst = arith.constant dense<0.000000e+00> : vector<16x128xf32>
    %3 = tpu.matmul %0, %1, %cst {dimension_numbers = #tpu.dot_dimension_numbers<[1], [0], [0], [1], [0, 0, 1, 1], [], []>} : vector<16x128xbf16>, vector<128x128xbf16>, vector<16x128xf32> -> vector<16x128xf32>
    %4 = vector.broadcast %2 : vector<1x128xf32> to vector<16x128xf32>
    %5 = arith.addf %3, %4 : vector<16x128xf32>
    %cst_5 = arith.constant 0.000000e+00 : f32
    %6 = vector.broadcast %cst_5 : f32 to vector<16x128xf32>
    %7 = arith.maximumf %5, %6 : vector<16x128xf32>
    %8 = arith.truncf %7 : vector<16x128xf32> to vector<16x128xbf16>
    %c0_6 = arith.constant 0 : index
    %c0_7 = arith.constant 0 : index
    %9 = vector.load %arg4[%c0_6, %c0_7] : memref<128x128xbf16, #tpu.memory_space<vmem>>, vector<128x128xbf16>
    %c0_8 = arith.constant 0 : index
    %c0_9 = arith.constant 0 : index
    %10 = vector.load %arg5[%c0_8, %c0_9] : memref<1x128xf32, #tpu.memory_space<vmem>>, vector<1x128xf32>
    %cst_10 = arith.constant dense<0.000000e+00> : vector<16x128xf32>
    %11 = tpu.matmul %8, %9, %cst_10 {dimension_numbers = #tpu.dot_dimension_numbers<[1], [0], [0], [1], [0, 0, 1, 1], [], []>} : vector<16x128xbf16>, vector<128x128xbf16>, vector<16x128xf32> -> vector<16x128xf32>
    %12 = vector.broadcast %10 : vector<1x128xf32> to vector<16x128xf32>
    %13 = arith.addf %11, %12 : vector<16x128xf32>
    %cst_11 = arith.constant 0.000000e+00 : f32
    %14 = vector.broadcast %cst_11 : f32 to vector<16x128xf32>
    %15 = arith.maximumf %13, %14 : vector<16x128xf32>
    %16 = arith.truncf %15 : vector<16x128xf32> to vector<16x128xbf16>
    %c0_12 = arith.constant 0 : index
    %c0_13 = arith.constant 0 : index
    %17 = vector.load %arg6[%c0_12, %c0_13] : memref<128x128xbf16, #tpu.memory_space<vmem>>, vector<128x128xbf16>
    %c0_14 = arith.constant 0 : index
    %c0_15 = arith.constant 0 : index
    %18 = vector.load %arg7[%c0_14, %c0_15] : memref<1x128xf32, #tpu.memory_space<vmem>>, vector<1x128xf32>
    %cst_16 = arith.constant dense<0.000000e+00> : vector<16x128xf32>
    %19 = tpu.matmul %16, %17, %cst_16 {dimension_numbers = #tpu.dot_dimension_numbers<[1], [0], [0], [1], [0, 0, 1, 1], [], []>} : vector<16x128xbf16>, vector<128x128xbf16>, vector<16x128xf32> -> vector<16x128xf32>
    %20 = vector.broadcast %18 : vector<1x128xf32> to vector<16x128xf32>
    %21 = arith.addf %19, %20 : vector<16x128xf32>
    %22 = arith.truncf %21 : vector<16x128xf32> to vector<16x128xbf16>
    %c0_17 = arith.constant 0 : index
    %c0_18 = arith.constant 0 : index
    %23 = vector.load %arg8[%c0_17, %c0_18] : memref<16x128xbf16, #tpu.memory_space<vmem>>, vector<16x128xbf16>
    tpu.vector_store %arg8[%c0_17, %c0_18], %22 {strides = array<i32>} : memref<16x128xbf16, #tpu.memory_space<vmem>>, vector<16x128xbf16>,
    return
  }
  func.func @transform_0(%arg0: i32) -> (i32, i32) {
    %c0_i32 = arith.constant 0 : i32
    %c0_i32_0 = arith.constant 0 : i32
    return %arg0, %c0_i32 : i32, i32
  }
  func.func @transform_1(%arg0: i32) -> (i32, i32) {
    %c0_i32 = arith.constant 0 : i32
    %c0_i32_0 = arith.constant 0 : i32
    %c0_i32_1 = arith.constant 0 : i32
    return %c0_i32, %c0_i32_0 : i32, i32
  }
  func.func @transform_2(%arg0: i32) -> (i32, i32) {
    %c0_i32 = arith.constant 0 : i32
    %c0_i32_0 = arith.constant 0 : i32
    %c0_i32_1 = arith.constant 0 : i32
    return %c0_i32, %c0_i32_0 : i32, i32
  }
  func.func @transform_3(%arg0: i32) -> (i32, i32) {
    %c0_i32 = arith.constant 0 : i32
    %c0_i32_0 = arith.constant 0 : i32
    %c0_i32_1 = arith.constant 0 : i32
    return %c0_i32, %c0_i32_0 : i32, i32
  }
  func.func @transform_4(%arg0: i32) -> (i32, i32) {
    %c0_i32 = arith.constant 0 : i32
    %c0_i32_0 = arith.constant 0 : i32
    %c0_i32_1 = arith.constant 0 : i32
    return %c0_i32, %c0_i32_0 : i32, i32
  }
  func.func @transform_5(%arg0: i32) -> (i32, i32) {
    %c0_i32 = arith.constant 0 : i32
    %c0_i32_0 = arith.constant 0 : i32
    %c0_i32_1 = arith.constant 0 : i32
    return %c0_i32, %c0_i32_0 : i32, i32
  }
  func.func @transform_6(%arg0: i32) -> (i32, i32) {
    %c0_i32 = arith.constant 0 : i32
    %c0_i32_0 = arith.constant 0 : i32
    %c0_i32_1 = arith.constant 0 : i32
    return %c0_i32, %c0_i32_0 : i32, i32
  }
  func.func @transform_7(%arg0: i32) -> (i32, i32) {
    %c0_i32 = arith.constant 0 : i32
    %c0_i32_0 = arith.constant 0 : i32
    return %arg0, %c0_i32 : i32, i32
  }
}

</mosaic_0001>

<llo_original>
// kernel: mlp_pallas.1
$region0: #{mlp_pallas.1}
  #allocation0 [shape = 'u32[]', space=smem, size = 0x4, offset = 0x4, fixed_abs, tag = 'smem constant byte address 0x4 - core index']
  #allocation1 [shape = 'u32[144,128]{1,0:T(1,128)}', space=vmem, size = 0x12000, scoped, tag = 'internal scratch']
  %s0 = inlined_call_operand.vmem [shape: bf16[16,128], index: 0, kind: input, shape index: {}]
  %s1 = inlined_call_operand.hbm [shape: bf16[128,128], index: 1, kind: input, shape index: {}]
  %s2 = inlined_call_operand.vmem [shape: f32[1,128], index: 2, kind: input, shape index: {}]
  %s3 = inlined_call_operand.hbm [shape: bf16[128,128], index: 3, kind: input, shape index: {}]
  %s4 = inlined_call_operand.vmem [shape: f32[1,128], index: 4, kind: input, shape index: {}]
  %s5 = inlined_call_operand.hbm [shape: bf16[128,128], index: 5, kind: input, shape index: {}]
  %s6 = inlined_call_operand.vmem [shape: f32[1,128], index: 6, kind: input, shape index: {}]
  %s7 = inlined_call_operand.vmem [shape: bf16[16,128], index: 7, kind: output, shape index: {}]
  %s8 = sld [smem:[#allocation0]]
  $region50: #{mlp_pallas.1} parent=0
    _
  %s10 = ssub.s32 1, %s8
  %s11 = scalar_select 0, %s10, %s8
  $region1: #{mlp_pallas.1} parent=0
    #allocation2 [shape = 'u8[32768]{0}', space=vmem, size = 0x8000, scoped, tag = 'input window, operand 1, single buffered']
    #allocation3 [shape = 's32[1]{0}', space=sflag, size = 0x4, scoped, tag = 'scoped memory for mlp_pallas.1']
    #allocation4 [shape = 'u8[32768]{0}', space=vmem, size = 0x8000, scoped, tag = 'input window, operand 3, single buffered']
    #allocation5 [shape = 's32[1]{0}', space=sflag, size = 0x4, scoped, tag = 'scoped memory for mlp_pallas.1']
    #allocation6 [shape = 'u8[32768]{0}', space=vmem, size = 0x8000, scoped, tag = 'input window, operand 5, single buffered']
    %12 = vsyncpa [#allocation3], 0
    %13 = vsyncpa [#allocation5], 0
    // Predicated region
    $region2: #{mlp_pallas.1} parent=1 // pred_check
      _
    $region3: #{mlp_pallas.1} parent=1 // pred_check_branch
      %15 = sbr.rel (0) target = $region5
    $region4: #{mlp_pallas.1} parent=1 // pred_region
      _
    $region5: #{mlp_pallas.1} parent=1 // pred_fallthru
      _
    // Predicated region
    $region6: #{mlp_pallas.1} parent=1 // pred_check
      _
    $region7: #{mlp_pallas.1} parent=1 // pred_check_branch
      %17 = sbr.rel (0) target = $region9
    $region8: #{mlp_pallas.1} parent=1 // pred_region
      %s19 = ssub.s32 1024, 1024
      %20 = vsyncadd [#allocation3], %s19
      %s21 = sshll.u32 [#allocation2], 4
      %s22 = int_to_ptr.vmem [resolvable:$true] %s21
      %27 = dma.hbm_to_vmem [thread:$0]  %s1, 1024, %s22, [#allocation3], 64, 64, 4
    $region9: #{mlp_pallas.1} parent=1 // pred_fallthru
      _
    // Predicated region
    $region10: #{mlp_pallas.1} parent=1 // pred_check
      _
    $region11: #{mlp_pallas.1} parent=1 // pred_check_branch
      %29 = sbr.rel (0) target = $region13
    $region12: #{mlp_pallas.1} parent=1 // pred_region
      _
    $region13: #{mlp_pallas.1} parent=1 // pred_fallthru
      _
    // Predicated region
    $region14: #{mlp_pallas.1} parent=1 // pred_check
      _
    $region15: #{mlp_pallas.1} parent=1 // pred_check_branch
      %31 = sbr.rel (0) target = $region17
    $region16: #{mlp_pallas.1} parent=1 // pred_region
      %s33 = ssub.s32 1024, 1024
      %34 = vsyncadd [#allocation5], %s33
      %s35 = sshll.u32 [#allocation4], 4
      %s36 = int_to_ptr.vmem [resolvable:$true] %s35
      %41 = dma.hbm_to_vmem [thread:$0]  %s3, 1024, %s36, [#allocation5], 64, 64, 4
    $region17: #{mlp_pallas.1} parent=1 // pred_fallthru
      _
    // Predicated region
    $region18: #{mlp_pallas.1} parent=1 // pred_check
      _
    $region19: #{mlp_pallas.1} parent=1 // pred_check_branch
      %43 = sbr.rel (0) target = $region21
    $region20: #{mlp_pallas.1} parent=1 // pred_region
      _
    $region21: #{mlp_pallas.1} parent=1 // pred_fallthru
      _
    // Predicated region
    $region22: #{mlp_pallas.1} parent=1 // pred_check
      _
    $region23: #{mlp_pallas.1} parent=1 // pred_check_branch
      %45 = sbr.rel (0) target = $region25
    $region24: #{mlp_pallas.1} parent=1 // pred_region
      %s47 = ssub.s32 1024, 1024
      %48 = vsyncadd [#allocation5], %s47
      %s49 = sshll.u32 [#allocation6], 4
      %s50 = int_to_ptr.vmem [resolvable:$true] %s49
      %55 = dma.hbm_to_vmem [thread:$0]  %s5, 1024, %s50, [#allocation5], 64, 64, 4
    $region25: #{mlp_pallas.1} parent=1 // pred_fallthru
      _
    // Predicated region
    $region26: #{mlp_pallas.1} parent=1 // pred_check
      _
    $region27: #{mlp_pallas.1} parent=1 // pred_check_branch
      %57 = sbr.rel (0) target = $region29
    $region28: #{mlp_pallas.1} parent=1 // pred_region
      _
    $region29: #{mlp_pallas.1} parent=1 // pred_fallthru
      _
    // Predicated region
    $region30: #{mlp_pallas.1} parent=1 // pred_check
      _
    $region31: #{mlp_pallas.1} parent=1 // pred_check_branch
      %59 = sbr.rel (0) target = $region33
    $region32: #{mlp_pallas.1} parent=1 // pred_region
      %60 = dma.done [#allocation3], 1024
    $region33: #{mlp_pallas.1} parent=1 // pred_fallthru
      _
    // Predicated region
    $region34: #{mlp_pallas.1} parent=1 // pred_check
      _
    $region35: #{mlp_pallas.1} parent=1 // pred_check_branch
      %62 = sbr.rel (0) target = $region37
    $region36: #{mlp_pallas.1} parent=1 // pred_region
      %63 = dma.done [#allocation5], 1024
    $region37: #{mlp_pallas.1} parent=1 // pred_fallthru
      _
    // Predicated region
    $region38: #{mlp_pallas.1} parent=1 // pred_check
      _
    $region39: #{mlp_pallas.1} parent=1 // pred_check_branch
      %65 = sbr.rel (0) target = $region41
    $region40: #{mlp_pallas.1} parent=1 // pred_region
      %66 = dma.done [#allocation5], 1024
    $region41: #{mlp_pallas.1} parent=1 // pred_fallthru
      _
    %v68 = vld [vmem:[%s0] sm:$0xf]
    %v69 = vld [vmem:[%s0 + $0x4] sm:$0xf]
    %v70 = vld [vmem:[#allocation2] sm:$0xf]
    %v71 = vld [vmem:[#allocation2 + $0x4] sm:$0xf]
    %v72 = vld [vmem:[#allocation2 + $0x8] sm:$0xf]
    %v73 = vld [vmem:[#allocation2 + $0xc] sm:$0xf]
    %v74 = vld [vmem:[#allocation2 + $0x10] sm:$0xf]
    %v75 = vld [vmem:[#allocation2 + $0x14] sm:$0xf]
    %v76 = vld [vmem:[#allocation2 + $0x18] sm:$0xf]
    %v77 = vld [vmem:[#allocation2 + $0x1c] sm:$0xf]
    %v78 = vld [vmem:[#allocation2 + $0x20] sm:$0xf]
    %v79 = vld [vmem:[#allocation2 + $0x24] sm:$0xf]
    %v80 = vld [vmem:[#allocation2 + $0x28] sm:$0xf]
    %v81 = vld [vmem:[#allocation2 + $0x2c] sm:$0xf]
    %v82 = vld [vmem:[#allocation2 + $0x30] sm:$0xf]
    %v83 = vld [vmem:[#allocation2 + $0x34] sm:$0xf]
    %v84 = vld [vmem:[#allocation2 + $0x38] sm:$0xf]
    %v85 = vld [vmem:[#allocation2 + $0x3c] sm:$0xf]
    %v86 = vld [vmem:[%s2] sm:$0x1]
    %v88 = vlaneseq
    %v89 = vshrl.u32 %v88, 7
    %v90 = vsub.s32 0, %v89
    %v91 = vrot.slane %v86, %v90
    %v95 = vunpack.c.l.b16 %v68
    %v96 = vunpack.c.l.b16 %v69
    %v97 = vpack.c.b16 %v96, %v95
    %v115 = vunpack.c.l.b16 %v70
    %v116 = vunpack.c.l.b16 %v71
    %v117 = vunpack.c.l.b16 %v72
    %v118 = vunpack.c.l.b16 %v73
    %v119 = vunpack.c.l.b16 %v74
    %v120 = vunpack.c.l.b16 %v75
    %v121 = vunpack.c.l.b16 %v76
    %v122 = vunpack.c.l.b16 %v77
    %v123 = vunpack.c.l.b16 %v78
    %v124 = vunpack.c.l.b16 %v79
    %v125 = vunpack.c.l.b16 %v80
    %v126 = vunpack.c.l.b16 %v81
    %v127 = vunpack.c.l.b16 %v82
    %v128 = vunpack.c.l.b16 %v83
    %v129 = vunpack.c.l.b16 %v84
    %v130 = vunpack.c.l.b16 %v85
    %v131 = vpack.c.b16 %v116, %v115
    %v132 = vpack.c.b16 %v118, %v117
    %v133 = vpack.c.b16 %v120, %v119
    %v134 = vpack.c.b16 %v122, %v121
    %v135 = vpack.c.b16 %v124, %v123
    %v136 = vpack.c.b16 %v126, %v125
    %v137 = vpack.c.b16 %v128, %v127
    %v138 = vpack.c.b16 %v130, %v129
    %147 = vmatprep.subr.bf16.mxu0 0
    %148 = vmatpush1.bf16.msra.mxu0 %v138
    %149 = vmatprep.subr.bf16.mxu0 0
    %150 = vmatpush1.bf16.msra.mxu0 %v137
    %151 = vmatprep.subr.bf16.mxu0 0
    %152 = vmatpush1.bf16.msra.mxu0 %v136
    %153 = vmatprep.subr.bf16.mxu0 0
    %154 = vmatpush1.bf16.msra.mxu0 %v135
    %155 = vmatprep.subr.bf16.mxu0 0
    %156 = vmatpush1.bf16.msra.mxu0 %v134
    %157 = vmatprep.subr.bf16.mxu0 0
    %158 = vmatpush1.bf16.msra.mxu0 %v133
    %159 = vmatprep.subr.bf16.mxu0 0
    %160 = vmatpush1.bf16.msra.mxu0 %v132
    %161 = vmatprep.subr.bf16.mxu0 0
    %162 = vmatpush1.bf16.msra.mxu0 %v131
    %163 = vmatprep.subr.bf16.mxu0 0
    %164 = vmatpush2.bf16.msra.mxu0 0
    %165 = vmatprep.subr.bf16.mxu0 0
    %166 = vmatpush2.bf16.msra.mxu0 0
    %167 = vmatprep.subr.bf16.mxu0 0
    %168 = vmatpush2.bf16.msra.mxu0 0
    %169 = vmatprep.subr.bf16.mxu0 0
    %170 = vmatpush2.bf16.msra.mxu0 0
    %171 = vmatprep.subr.bf16.mxu0 0
    %172 = vmatpush2.bf16.msra.mxu0 0
    %173 = vmatprep.subr.bf16.mxu0 0
    %174 = vmatpush2.bf16.msra.mxu0 0
    %175 = vmatprep.subr.bf16.mxu0 0
    %176 = vmatpush2.bf16.msra.mxu0 0
    %177 = vmatprep.subr.bf16.mxu0 0
    %178 = vmatpush2.bf16.msra.mxu0 0
    %179 = vmatprep.mubr.bf16.mxu0 0
    %180 = vmatmul.mubr.bf16.gmra.mxu0 %v97
    %v181 = vpop.f32.mrf.mxu0
    %v182 = vadd.f32 %v91, %v181
    %v183 = vpop.f32.mrf.mxu0
    %v184 = vpop.f32.mrf.mxu0
    %v185 = vadd.f32 %v91, %v184
    %v186 = vpop.f32.mrf.mxu0
    %187 = vdwg.mxu0
    %v188 = vmax.f32 %v182, 0.0
    %v189 = vmax.f32 %v185, 0.0
    %v190 = vpack.c.bf16 %v189, %v188
    %v191 = vld [vmem:[#allocation4] sm:$0xf]
    %v192 = vld [vmem:[#allocation4 + $0x4] sm:$0xf]
    %v193 = vld [vmem:[#allocation4 + $0x8] sm:$0xf]
    %v194 = vld [vmem:[#allocation4 + $0xc] sm:$0xf]
    %v195 = vld [vmem:[#allocation4 + $0x10] sm:$0xf]
    %v196 = vld [vmem:[#allocation4 + $0x14] sm:$0xf]
    %v197 = vld [vmem:[#allocation4 + $0x18] sm:$0xf]
    %v198 = vld [vmem:[#allocation4 + $0x1c] sm:$0xf]
    %v199 = vld [vmem:[#allocation4 + $0x20] sm:$0xf]
    %v200 = vld [vmem:[#allocation4 + $0x24] sm:$0xf]
    %v201 = vld [vmem:[#allocation4 + $0x28] sm:$0xf]
    %v202 = vld [vmem:[#allocation4 + $0x2c] sm:$0xf]
    %v203 = vld [vmem:[#allocation4 + $0x30] sm:$0xf]
    %v204 = vld [vmem:[#allocation4 + $0x34] sm:$0xf]
    %v205 = vld [vmem:[#allocation4 + $0x38] sm:$0xf]
    %v206 = vld [vmem:[#allocation4 + $0x3c] sm:$0xf]
    %v207 = vld [vmem:[%s4] sm:$0x1]
    %v209 = vlaneseq
    %v210 = vshrl.u32 %v209, 7
    %v211 = vsub.s32 0, %v210
    %v212 = vrot.slane %v207, %v211
    %v230 = vunpack.c.l.b16 %v191
    %v231 = vunpack.c.l.b16 %v192
    %v232 = vunpack.c.l.b16 %v193
    %v233 = vunpack.c.l.b16 %v194
    %v234 = vunpack.c.l.b16 %v195
    %v235 = vunpack.c.l.b16 %v196
    %v236 = vunpack.c.l.b16 %v197
    %v237 = vunpack.c.l.b16 %v198
    %v238 = vunpack.c.l.b16 %v199
    %v239 = vunpack.c.l.b16 %v200
    %v240 = vunpack.c.l.b16 %v201
    %v241 = vunpack.c.l.b16 %v202
    %v242 = vunpack.c.l.b16 %v203
    %v243 = vunpack.c.l.b16 %v204
    %v244 = vunpack.c.l.b16 %v205
    %v245 = vunpack.c.l.b16 %v206
    %v246 = vpack.c.b16 %v231, %v230
    %v247 = vpack.c.b16 %v233, %v232
    %v248 = vpack.c.b16 %v235, %v234
    %v249 = vpack.c.b16 %v237, %v236
    %v250 = vpack.c.b16 %v239, %v238
    %v251 = vpack.c.b16 %v241, %v240
    %v252 = vpack.c.b16 %v243, %v242
    %v253 = vpack.c.b16 %v245, %v244
    %262 = vmatprep.subr.bf16.mxu0 0
    %263 = vmatpush1.bf16.msra.mxu0 %v253
    %264 = vmatprep.subr.bf16.mxu0 0
    %265 = vmatpush1.bf16.msra.mxu0 %v252
    %266 = vmatprep.subr.bf16.mxu0 0
    %267 = vmatpush1.bf16.msra.mxu0 %v251
    %268 = vmatprep.subr.bf16.mxu0 0
    %269 = vmatpush1.bf16.msra.mxu0 %v250
    %270 = vmatprep.subr.bf16.mxu0 0
    %271 = vmatpush1.bf16.msra.mxu0 %v249
    %272 = vmatprep.subr.bf16.mxu0 0
    %273 = vmatpush1.bf16.msra.mxu0 %v248
    %274 = vmatprep.subr.bf16.mxu0 0
    %275 = vmatpush1.bf16.msra.mxu0 %v247
    %276 = vmatprep.subr.bf16.mxu0 0
    %277 = vmatpush1.bf16.msra.mxu0 %v246
    %278 = vmatprep.subr.bf16.mxu0 0
    %279 = vmatpush2.bf16.msra.mxu0 0
    %280 = vmatprep.subr.bf16.mxu0 0
    %281 = vmatpush2.bf16.msra.mxu0 0
    %282 = vmatprep.subr.bf16.mxu0 0
    %283 = vmatpush2.bf16.msra.mxu0 0
    %284 = vmatprep.subr.bf16.mxu0 0
    %285 = vmatpush2.bf16.msra.mxu0 0
    %286 = vmatprep.subr.bf16.mxu0 0
    %287 = vmatpush2.bf16.msra.mxu0 0
    %288 = vmatprep.subr.bf16.mxu0 0
    %289 = vmatpush2.bf16.msra.mxu0 0
    %290 = vmatprep.subr.bf16.mxu0 0
    %291 = vmatpush2.bf16.msra.mxu0 0
    %292 = vmatprep.subr.bf16.mxu0 0
    %293 = vmatpush2.bf16.msra.mxu0 0
    %294 = vmatprep.mubr.bf16.mxu0 0
    %295 = vmatmul.mubr.bf16.gmra.mxu0 %v190
    %v296 = vpop.f32.mrf.mxu0
    %v297 = vadd.f32 %v212, %v296
    %v298 = vpop.f32.mrf.mxu0
    %v299 = vpop.f32.mrf.mxu0
    %v300 = vadd.f32 %v212, %v299
    %v301 = vpop.f32.mrf.mxu0
    %302 = vdwg.mxu0
    %v303 = vmax.f32 %v297, 0.0
    %v304 = vmax.f32 %v300, 0.0
    %v305 = vpack.c.bf16 %v304, %v303
    %v306 = vld [vmem:[#allocation6] sm:$0xf]
    %v307 = vld [vmem:[#allocation6 + $0x4] sm:$0xf]
    %v308 = vld [vmem:[#allocation6 + $0x8] sm:$0xf]
    %v309 = vld [vmem:[#allocation6 + $0xc] sm:$0xf]
    %v310 = vld [vmem:[#allocation6 + $0x10] sm:$0xf]
    %v311 = vld [vmem:[#allocation6 + $0x14] sm:$0xf]
    %v312 = vld [vmem:[#allocation6 + $0x18] sm:$0xf]
    %v313 = vld [vmem:[#allocation6 + $0x1c] sm:$0xf]
    %v314 = vld [vmem:[#allocation6 + $0x20] sm:$0xf]
    %v315 = vld [vmem:[#allocation6 + $0x24] sm:$0xf]
    %v316 = vld [vmem:[#allocation6 + $0x28] sm:$0xf]
    %v317 = vld [vmem:[#allocation6 + $0x2c] sm:$0xf]
    %v318 = vld [vmem:[#allocation6 + $0x30] sm:$0xf]
    %v319 = vld [vmem:[#allocation6 + $0x34] sm:$0xf]
    %v320 = vld [vmem:[#allocation6 + $0x38] sm:$0xf]
    %v321 = vld [vmem:[#allocation6 + $0x3c] sm:$0xf]
    %v322 = vld [vmem:[%s6] sm:$0x1]
    %v324 = vlaneseq
    %v325 = vshrl.u32 %v324, 7
    %v326 = vsub.s32 0, %v325
    %v327 = vrot.slane %v322, %v326
    %v345 = vunpack.c.l.b16 %v306
    %v346 = vunpack.c.l.b16 %v307
    %v347 = vunpack.c.l.b16 %v308
    %v348 = vunpack.c.l.b16 %v309
    %v349 = vunpack.c.l.b16 %v310
    %v350 = vunpack.c.l.b16 %v311
    %v351 = vunpack.c.l.b16 %v312
    %v352 = vunpack.c.l.b16 %v313
    %v353 = vunpack.c.l.b16 %v314
    %v354 = vunpack.c.l.b16 %v315
    %v355 = vunpack.c.l.b16 %v316
    %v356 = vunpack.c.l.b16 %v317
    %v357 = vunpack.c.l.b16 %v318
    %v358 = vunpack.c.l.b16 %v319
    %v359 = vunpack.c.l.b16 %v320
    %v360 = vunpack.c.l.b16 %v321
    %v361 = vpack.c.b16 %v346, %v345
    %v362 = vpack.c.b16 %v348, %v347
    %v363 = vpack.c.b16 %v350, %v349
    %v364 = vpack.c.b16 %v352, %v351
    %v365 = vpack.c.b16 %v354, %v353
    %v366 = vpack.c.b16 %v356, %v355
    %v367 = vpack.c.b16 %v358, %v357
    %v368 = vpack.c.b16 %v360, %v359
    %377 = vmatprep.subr.bf16.mxu0 0
    %378 = vmatpush1.bf16.msra.mxu0 %v368
    %379 = vmatprep.subr.bf16.mxu0 0
    %380 = vmatpush1.bf16.msra.mxu0 %v367
    %381 = vmatprep.subr.bf16.mxu0 0
    %382 = vmatpush1.bf16.msra.mxu0 %v366
    %383 = vmatprep.subr.bf16.mxu0 0
    %384 = vmatpush1.bf16.msra.mxu0 %v365
    %385 = vmatprep.subr.bf16.mxu0 0
    %386 = vmatpush1.bf16.msra.mxu0 %v364
    %387 = vmatprep.subr.bf16.mxu0 0
    %388 = vmatpush1.bf16.msra.mxu0 %v363
    %389 = vmatprep.subr.bf16.mxu0 0
    %390 = vmatpush1.bf16.msra.mxu0 %v362
    %391 = vmatprep.subr.bf16.mxu0 0
    %392 = vmatpush1.bf16.msra.mxu0 %v361
    %393 = vmatprep.subr.bf16.mxu0 0
    %394 = vmatpush2.bf16.msra.mxu0 0
    %395 = vmatprep.subr.bf16.mxu0 0
    %396 = vmatpush2.bf16.msra.mxu0 0
    %397 = vmatprep.subr.bf16.mxu0 0
    %398 = vmatpush2.bf16.msra.mxu0 0
    %399 = vmatprep.subr.bf16.mxu0 0
    %400 = vmatpush2.bf16.msra.mxu0 0
    %401 = vmatprep.subr.bf16.mxu0 0
    %402 = vmatpush2.bf16.msra.mxu0 0
    %403 = vmatprep.subr.bf16.mxu0 0
    %404 = vmatpush2.bf16.msra.mxu0 0
    %405 = vmatprep.subr.bf16.mxu0 0
    %406 = vmatpush2.bf16.msra.mxu0 0
    %407 = vmatprep.subr.bf16.mxu0 0
    %408 = vmatpush2.bf16.msra.mxu0 0
    %409 = vmatprep.mubr.bf16.mxu0 0
    %410 = vmatmul.mubr.bf16.gmra.mxu0 %v305
    %v411 = vpop.f32.mrf.mxu0
    %v412 = vadd.f32 %v327, %v411
    %v413 = vpop.f32.mrf.mxu0
    %v414 = vpop.f32.mrf.mxu0
    %v415 = vadd.f32 %v327, %v414
    %v416 = vpop.f32.mrf.mxu0
    %417 = vdwg.mxu0
    %v418 = vpack.c.bf16 %v415, %v412
    %v420 = vunpack.c.l.b16 %v418
    %v421 = vunpack.c.h.b16 %v418
    %v422 = vpack.c.b16 %v420, %v420
    %v423 = vpack.c.b16 %v421, %v421
    %426 = vst [vmem:[%s7] sm:$0xf] %v422
    %427 = vst [vmem:[%s7 + $0x4] sm:$0xf] %v423
    // Predicated region
    $region42: #{mlp_pallas.1} parent=1 // pred_check
      _
    $region43: #{mlp_pallas.1} parent=1 // pred_check_branch
      %429 = sbr.rel (0) target = $region45
    $region44: #{mlp_pallas.1} parent=1 // pred_region
      _
    $region45: #{mlp_pallas.1} parent=1 // pred_fallthru
      _
    // Predicated region
    $region46: #{mlp_pallas.1} parent=1 // pred_check
      _
    $region47: #{mlp_pallas.1} parent=1 // pred_check_branch
      %431 = sbr.rel (0) target = $region49
    $region48: #{mlp_pallas.1} parent=1 // pred_region
      _
    $region49: #{mlp_pallas.1} parent=1 // pred_fallthru
      _
    %432 = vsyncpa [#allocation3], 1
    %433 = vsyncpa [#allocation5], 1

</llo_original>
